<compile_context>
chip_gen: v7x
topology: tpu7x:2x2x1
jax: 0.10.0
libtpu: 0.0.40
codegen_flags: <defaults>
</compile_context>

<pallas_src>
import jax
import jax.numpy as jnp
from jax.experimental import pallas as pl
from jax.experimental.pallas import tpu as pltpu


def _round_up(x: int, m: int) -> int:
    return ((x + m - 1) // m) * m


def _default_tile_rows() -> int:
    """Per-chip default row tile.

    v5-class: ~0.8 MiB of useful output per step is already ~1 us of DMA at
    ~0.8 TB/s (well past the ~0.35 us/step overhead) and v5e's default scoped VMEM
    is only 16 MiB, so keep 4096.  v6e/v7x-class: bigger tiles so 3.2 TB/s HBM does
    not drain a tile faster than the fixed per-step overhead.
    """
    try:
        kind = jax.devices()[0].device_kind.lower()
    except Exception:
        kind = ""
    return 4096 if "v5" in kind else 8192


def _gaussian_smearing_kernel(start: float, delta: float, coeff: float, num_gaussians: int):
    def kernel(dist_ref, out_ref):
        # dist_ref: (tm, 1) f32   out_ref: (tm, G) out_dtype
        g = jax.lax.broadcasted_iota(jnp.int32, (1, num_gaussians), 1).astype(jnp.float32)
        offset = start + delta * g                  # (1, G) compile-time linspace (VPU)
        d = dist_ref[...] - offset                  # (tm, 1) - (1, G) -> (tm, G)
        out_ref[...] = jnp.exp(coeff * d * d).astype(out_ref.dtype)   # exp on EUP
    return kernel


def gaussian_smearing(dist, *, start=0.0, stop=5.0, num_gaussians=50,
                      tile_rows=None, out_dtype=jnp.float32):
    """JAX/Pallas equivalent of GaussianSmearing.forward.

    dist: any-shape float array.  Returns (dist.size, num_gaussians) in `out_dtype`.
    Arithmetic is always float32; pass out_dtype=jnp.bfloat16 to halve HBM writeback
    when downstream code tolerates bf16 (recommended for large N).
    """
    if num_gaussians < 2:
        raise ValueError("num_gaussians must be >= 2 (the PyTorch module also requires this).")

    # Compile-time scalars, computed purely in Python (no device->host sync).
    delta = (float(stop) - float(start)) / (num_gaussians - 1)
    coeff = -0.5 / delta ** 2

    dist_flat = dist.reshape(-1, 1).astype(jnp.float32)    # (N, 1)
    n = dist_flat.shape[0]
    if n == 0:
        return jnp.zeros((0, num_gaussians), dtype=out_dtype)

    tm = int(tile_rows) if tile_rows is not None else _default_tile_rows()

    # Sublane alignment of the output block: 8 rows for 4-byte, 16 for 2-byte, 32 for
    # 1-byte output dtypes (input is f32, so >= 8 always also satisfies the input).
    itemsize_out = jnp.dtype(out_dtype).itemsize
    align = max(8, 32 // max(1, itemsize_out))

    if n >= 2 * align:
        tm_req = max(align, _round_up(min(tm, n), align))
        # >= 2 balanced grid steps so the "parallel" axis can shard across both
        # TensorCores on v7x; large N naturally gives many steps.
        num_blocks = max(2, pl.cdiv(n, tm_req))
        tm_eff = _round_up(pl.cdiv(n, num_blocks), align)
    else:
        # Tiny inputs: a single block whose row dim equals the full array dim
        # (allowed by the (8,128)/(16,128) rule even when not a multiple of align).
        tm_eff = n
    grid = (pl.cdiv(n, tm_eff),)   # last block may be partial; Pallas clips the DMA

    # Explicit VMEM budget: the (tm,1) f32 input block is lane-padded to 128 lanes in
    # VMEM, and the (tm,G) output block is lane-padded to 128; both double-buffered.
    vmem_needed = 2 * tm_eff * 128 * 4 + 2 * tm_eff * 128 * itemsize_out
    vmem_limit = min(int(vmem_needed * 3 // 2) + (4 << 20), 64 << 20)

    return pl.pallas_call(
        _gaussian_smearing_kernel(float(start), delta, coeff, num_gaussians),
        out_shape=jax.ShapeDtypeStruct((n, num_gaussians), out_dtype),
        grid_spec=pltpu.PrefetchScalarGridSpec(
            num_scalar_prefetch=0,
            grid=grid,
            in_specs=[
                # (tm, 1): last dim equals the full array dim; row dim is align-multiple
                pl.BlockSpec((tm_eff, 1), lambda i: (i, 0)),
            ],
            out_specs=pl.BlockSpec((tm_eff, num_gaussians), lambda i: (i, 0)),
        ),
        compiler_params=pltpu.CompilerParams(
            dimension_semantics=("parallel",),
            vmem_limit_bytes=vmem_limit,
        ),
    )(dist_flat)


if __name__ == "__main__":
    key = jax.random.PRNGKey(0)
    # 128 pairwise distances in [0, 5), e.g. edge lengths of a small molecular graph.
    dist = jax.random.uniform(key, (2, 64), dtype=jnp.float32, minval=0.0, maxval=5.0)

    out = jax.block_until_ready(
        gaussian_smearing(dist, start=0.0, stop=5.0, num_gaussians=50))

    # Pure-JAX reference (same math as the PyTorch module).
    offset = jnp.linspace(0.0, 5.0, 50, dtype=jnp.float32)
    delta = 5.0 / 49.0
    coeff = -0.5 / delta ** 2
    ref = jnp.exp(coeff * (dist.reshape(-1, 1) - offset.reshape(1, -1)) ** 2)

    assert out.shape == (128, 50), out.shape
    assert out.dtype == jnp.float32
    assert jnp.allclose(out, ref, atol=1e-5, rtol=1e-5)

    # Recommended low-writeback path: bf16 store (arithmetic stays f32).
    out_bf16 = jax.block_until_ready(gaussian_smearing(dist, out_dtype=jnp.bfloat16))
    assert out_bf16.shape == (128, 50)
    assert out_bf16.dtype == jnp.bfloat16
    assert jnp.allclose(out_bf16.astype(jnp.float32), ref, atol=8e-3, rtol=4e-2)

    print("KERNEL_OK")
</pallas_src>

<mosaic_0001>
module attributes {stable_mosaic.version = 11 : i64} {
  func.func @kernel(%arg0: i32, %arg1: memref<64x1xf32, #tpu.memory_space<vmem>>, %arg2: memref<64x50xf32, #tpu.memory_space<vmem>>) attributes {dimension_semantics = [#tpu.dimension_semantics<parallel>], iteration_bounds = array<i64: 2>, scalar_prefetch = 0 : i64, scratch_operands = 0 : i64, tpu.core_type = #tpu.core_type<tc>, window_params = [{transform_indices = @transform_0, window_bounds = array<i64: 64, 1>}, {transform_indices = @transform_1, window_bounds = array<i64: 64, 50>}]} {
    %0 = tpu.iota {dimensions = array<i32: 1>} : vector<1x50xi32>
    %1 = arith.sitofp %0 : vector<1x50xi32> to vector<1x50xf32>
    %cst = arith.constant 0.10204082 : f32
    %2 = vector.broadcast %cst : f32 to vector<1x50xf32>
    %3 = arith.mulf %2, %1 : vector<1x50xf32>
    %cst_0 = arith.constant 0.000000e+00 : f32
    %4 = vector.broadcast %cst_0 : f32 to vector<1x50xf32>
    %5 = arith.addf %4, %3 : vector<1x50xf32>
    %c0 = arith.constant 0 : index
    %c0_1 = arith.constant 0 : index
    %6 = vector.load %arg1[%c0, %c0_1] : memref<64x1xf32, #tpu.memory_space<vmem>>, vector<64x1xf32>
    %7 = vector.broadcast %6 : vector<64x1xf32> to vector<64x50xf32>
    %8 = vector.broadcast %5 : vector<1x50xf32> to vector<64x50xf32>
    %9 = arith.subf %7, %8 : vector<64x50xf32>
    %cst_2 = arith.constant -4.802000e+01 : f32
    %10 = vector.broadcast %cst_2 : f32 to vector<64x50xf32>
    %11 = arith.mulf %10, %9 : vector<64x50xf32>
    %12 = arith.mulf %11, %9 : vector<64x50xf32>
    %13 = math.exp %12 : vector<64x50xf32>
    %c0_3 = arith.constant 0 : index
    %c0_4 = arith.constant 0 : index
    %14 = vector.load %arg2[%c0_3, %c0_4] : memref<64x50xf32, #tpu.memory_space<vmem>>, vector<64x50xf32>
    tpu.vector_store %arg2[%c0_3, %c0_4], %13 {strides = array<i32>} : memref<64x50xf32, #tpu.memory_space<vmem>>, vector<64x50xf32>,
    return
  }
  func.func @transform_0(%arg0: i32) -> (i32, i32) {
    %c0_i32 = arith.constant 0 : i32
    %c0_i32_0 = arith.constant 0 : i32
    return %arg0, %c0_i32 : i32, i32
  }
  func.func @transform_1(%arg0: i32) -> (i32, i32) {
    %c0_i32 = arith.constant 0 : i32
    %c0_i32_0 = arith.constant 0 : i32
    return %arg0, %c0_i32 : i32, i32
  }
}

</mosaic_0001>

<llo_original>
// kernel: tpu_custom_call.1
$region0: #{tpu_custom_call.1}
  #allocation0 [shape = 'u32[]', space=smem, size = 0x4, offset = 0x4, fixed_abs, tag = 'smem constant byte address 0x4 - core index']
  #allocation1 [shape = 'u32[144,128]{1,0:T(1,128)}', space=vmem, size = 0x12000, scoped, tag = 'internal scratch']
  %s0 = inlined_call_operand.vmem [shape: f32[128,1], index: 0, kind: input, shape index: {}]
  %s1 = inlined_call_operand.vmem [shape: f32[128,50], index: 1, kind: output, shape index: {}]
  %s2 = sld [smem:[#allocation0]]
  $region37: #{tpu_custom_call.1} parent=0
    _
  %s4 = ssub.s32 1, %s2
  %s5 = scalar_select 0, %s4, %s2
  loop: start=0, step=1, limit=4
  $region2: #{tpu_custom_call.1} parent=0 // loop_pre_header
    _
  $region3: #{tpu_custom_call.1} parent=0 // loop_header
    %s7 = sphi 0, %s11
    %p8 = scmp.ge.s32.totalorder %s7, 4
    %s17 = sphi 0, %s19
    %s20 = sphi 0, %s17
    %s21 = sphi 0, %s20
    %s37 = sphi 0, %s21
    %s43 = sphi 0, %s45
    %s46 = sphi 0, %s43
    %s47 = sphi 0, %s46
    %s63 = sphi 0, %s47
  $region4: #{tpu_custom_call.1} parent=0 // loop_header_branch
    %10 = sbr.rel (%p8) target = $region8
  $region5: #{tpu_custom_call.1} parent=0 // loop_body
    %s12 = ssub.s32 %s7, 1
    %s13 = ssub.s32 %s7, 2
    %s14 = sadd.s32 %s7, 1
    %s15 = ssub.s32 %s7, %s14
    %p16 = scmp.eq.s32.totalorder %s15, 0
    %s18 = sadd.s32 %s17, 1
    %s19 = scalar_select %p16, %s17, %s18
    %p22 = pneg %p16
    %p23 = scmp.eq.s32.totalorder %s7, 1
    %p24 = por %p22, %p23
    %p25 = scmp.ne.s32.totalorder %s17, %s20
    %p26 = scmp.eq.s32.totalorder %s7, 0
    %p27 = por %p25, %p26
    %p28 = scmp.ne.s32.totalorder %s17, %s20
    %p29 = scmp.eq.s32.totalorder %s12, 1
    %p30 = por %p28, %p29
    %p31 = scmp.ne.s32.totalorder %s20, %s21
    %p32 = scmp.eq.s32.totalorder %s12, 0
    %p33 = por %p31, %p32
    %p34 = scmp.ne.s32.totalorder %s20, %s21
    %p35 = scmp.eq.s32.totalorder %s13, 1
    %p36 = por %p34, %p35
    %p38 = scmp.ne.s32.totalorder %s21, %s37
    %p39 = scmp.eq.s32.totalorder %s13, 0
    %p40 = por %p38, %p39
    %s41 = ssub.s32 %s7, %s14
    %p42 = scmp.eq.s32.totalorder %s41, 0
    %s44 = sadd.s32 %s43, 1
    %s45 = scalar_select %p42, %s43, %s44
    %p48 = pneg %p42
    %p49 = scmp.eq.s32.totalorder %s7, 1
    %p50 = por %p48, %p49
    %p51 = scmp.ne.s32.totalorder %s43, %s46
    %p52 = scmp.eq.s32.totalorder %s7, 0
    %p53 = por %p51, %p52
    %p54 = scmp.ne.s32.totalorder %s43, %s46
    %p55 = scmp.eq.s32.totalorder %s12, 1
    %p56 = por %p54, %p55
    %p57 = scmp.ne.s32.totalorder %s46, %s47
    %p58 = scmp.eq.s32.totalorder %s12, 0
    %p59 = por %p57, %p58
    %p60 = scmp.ne.s32.totalorder %s46, %s47
    %p61 = scmp.eq.s32.totalorder %s13, 1
    %p62 = por %p60, %p61
    %p64 = scmp.ne.s32.totalorder %s47, %s63
    %p65 = scmp.eq.s32.totalorder %s13, 0
    %p66 = por %p64, %p65
    %p67 = scmp.le.s32.totalorder 1, %s7
    %p68 = scmp.lt.s32.totalorder %s7, 3
    %p69 = pnand %p67, %p68
    %p70 = pneg %p69
    // Predicated region
    $region9: #{tpu_custom_call.1} parent=5 // pred_check
      _
    $region10: #{tpu_custom_call.1} parent=5 // pred_check_branch
      %72 = sbr.rel (%p69) target = $region12
    $region11: #{tpu_custom_call.1} parent=5 // pred_region
      %s73 = ssub.s32 %s7, 1
    $region12: #{tpu_custom_call.1} parent=5 // pred_fallthru
      _
    %p74 = scmp.lt.s32.totalorder %s7, 2
    // Predicated region
    $region13: #{tpu_custom_call.1} parent=5 // pred_check
      %p75 = pneg %p74
    $region14: #{tpu_custom_call.1} parent=5 // pred_check_branch
      %77 = sbr.rel (%p75) target = $region16
    $region15: #{tpu_custom_call.1} parent=5 // pred_region
      // Predicated region
      $region17: #{tpu_custom_call.1} parent=15 // pred_check
        %p78 = pneg %p27
      $region18: #{tpu_custom_call.1} parent=15 // pred_check_branch
        %80 = sbr.rel (%p78) target = $region20
      $region19: #{tpu_custom_call.1} parent=15 // pred_region
        %s81 = smul.u32 8, %s7
        %p82 = scmp.lt.s32.totalorder %s81, 15
        %s83 = scalar_select %p82, %s81, 15
        %s84 = smul.addr %s83, 8
        %s85 = scalar_lea.vmem %s0, %s84
        %s86 = smul.u32 8, %s7
      $region20: #{tpu_custom_call.1} parent=15 // pred_fallthru
        _
    $region16: #{tpu_custom_call.1} parent=5 // pred_fallthru
      _
    %p87 = scmp.le.s32.totalorder 1, %s7
    %p88 = scmp.lt.s32.totalorder %s7, 3
    %p89 = pnand %p87, %p88
    %p90 = pneg %p89
    // Predicated region
    $region21: #{tpu_custom_call.1} parent=5 // pred_check
      _
    $region22: #{tpu_custom_call.1} parent=5 // pred_check_branch
      %92 = sbr.rel (%p89) target = $region24
    $region23: #{tpu_custom_call.1} parent=5 // pred_region
      %s93 = ssub.s32 %s7, 1
      %s94 = smul.u32 8, %s12
      %p95 = scmp.lt.s32.totalorder %s94, 15
      %s96 = scalar_select %p95, %s94, 15
      %s97 = smul.addr %s96, 8
      %s98 = scalar_lea.vmem %s0, %s97
      %p99 = pneg %p33
      %p100 = pneg %p30
      %p101 = pneg %p59
      %p102 = pneg %p56
      %s103 = smul.u32 8, %s12
      %p104 = scmp.lt.s32.totalorder %s103, 15
      %s105 = scalar_select %p104, %s103, 15
      %s106 = smul.addr %s105, 8
      %s107 = scalar_lea.vmem %s1, %s106
      %s108 = smul.u32 8, %s12
      %p109 = scmp.lt.s32.totalorder %s108, 15
      %s110 = scalar_select %p109, %s108, 15
      %s111 = smul.addr %s110, 8
      %s112 = scalar_lea.vmem %s0, %s111
      %s113 = smul.u32 8, %s12
      %s114 = smul.u32 8, %s12
      %p115 = scmp.lt.s32.totalorder %s114, 15
      %s116 = scalar_select %p115, %s114, 15
      %s117 = smul.addr %s116, 8
      %s118 = scalar_lea.vmem %s1, %s117
      %s119 = smul.u32 8, %s12
      %v120 = vlaneseq
      %v121 = vand.u32 %v120, 127
      %v122 = vcvt.s32.f32 %v121
      %v123 = vmul.f32 %v122, 0.10204082
      %v124 = vadd.f32 %v123, 0.0
      %v125 = vld [vmem:[%s112] sm:$0xff]
      %v126 = vld [vmem:[%s112 + $0x8] sm:$0xff]
      %v127 = vld [vmem:[%s112 + $0x10] sm:$0xff]
      %v128 = vld [vmem:[%s112 + $0x18] sm:$0xff]
      %v129 = vld [vmem:[%s112 + $0x20] sm:$0xff]
      %v130 = vld [vmem:[%s112 + $0x28] sm:$0xff]
      %v131 = vld [vmem:[%s112 + $0x30] sm:$0xff]
      %v132 = vld [vmem:[%s112 + $0x38] sm:$0xff]
      %134 = vset.pattern.permute.xlu0 0
      %135 = vperm.xlu0 %134, %v125
      %v136 = vpop.permute.xlu0 %135
      %139 = vset.pattern.permute.xlu0 0
      %140 = vperm.xlu0 %139, %v126
      %v141 = vpop.permute.xlu0 %140
      %144 = vset.pattern.permute.xlu0 0
      %145 = vperm.xlu0 %144, %v127
      %v146 = vpop.permute.xlu0 %145
      %149 = vset.pattern.permute.xlu0 0
      %150 = vperm.xlu0 %149, %v128
      %v151 = vpop.permute.xlu0 %150
      %154 = vset.pattern.permute.xlu0 0
      %155 = vperm.xlu0 %154, %v129
      %v156 = vpop.permute.xlu0 %155
      %159 = vset.pattern.permute.xlu0 0
      %160 = vperm.xlu0 %159, %v130
      %v161 = vpop.permute.xlu0 %160
      %164 = vset.pattern.permute.xlu0 0
      %165 = vperm.xlu0 %164, %v131
      %v166 = vpop.permute.xlu0 %165
      %169 = vset.pattern.permute.xlu0 0
      %170 = vperm.xlu0 %169, %v132
      %v171 = vpop.permute.xlu0 %170
      %v173 = vsub.f32 %v136, %v124
      %v174 = vsub.f32 %v141, %v124
      %v175 = vsub.f32 %v146, %v124
      %v176 = vsub.f32 %v151, %v124
      %v177 = vsub.f32 %v156, %v124
      %v178 = vsub.f32 %v161, %v124
      %v179 = vsub.f32 %v166, %v124
      %v180 = vsub.f32 %v171, %v124
      %v181 = vmul.f32 %v173, -48.02
      %v182 = vmul.f32 %v174, -48.02
      %v183 = vmul.f32 %v175, -48.02
      %v184 = vmul.f32 %v176, -48.02
      %v185 = vmul.f32 %v177, -48.02
      %v186 = vmul.f32 %v178, -48.02
      %v187 = vmul.f32 %v179, -48.02
      %v188 = vmul.f32 %v180, -48.02
      %v189 = vmul.f32 %v181, %v173
      %v190 = vmul.f32 %v182, %v174
      %v191 = vmul.f32 %v183, %v175
      %v192 = vmul.f32 %v184, %v176
      %v193 = vmul.f32 %v185, %v177
      %v194 = vmul.f32 %v186, %v178
      %v195 = vmul.f32 %v187, %v179
      %v196 = vmul.f32 %v188, %v180
      %v197 = vmul.f32 %v189, 1.442695
      %v198 = vpow.pop %v197
      %v199 = vmul.f32 %v190, 1.442695
      %v200 = vpow.pop %v199
      %v201 = vmul.f32 %v191, 1.442695
      %v202 = vpow.pop %v201
      %v203 = vmul.f32 %v192, 1.442695
      %v204 = vpow.pop %v203
      %v205 = vmul.f32 %v193, 1.442695
      %v206 = vpow.pop %v205
      %v207 = vmul.f32 %v194, 1.442695
      %v208 = vpow.pop %v207
      %v209 = vmul.f32 %v195, 1.442695
      %v210 = vpow.pop %v209
      %v211 = vmul.f32 %v196, 1.442695
      %v212 = vpow.pop %v211
      %vm213 = vcmask 408576
      %214 = vst.msk [vmem:[%s118] sm:$0xff] %vm213, %v198
      %215 = vst.msk [vmem:[%s118 + $0x8] sm:$0xff] %vm213, %v200
      %216 = vst.msk [vmem:[%s118 + $0x10] sm:$0xff] %vm213, %v202
      %217 = vst.msk [vmem:[%s118 + $0x18] sm:$0xff] %vm213, %v204
      %218 = vst.msk [vmem:[%s118 + $0x20] sm:$0xff] %vm213, %v206
      %219 = vst.msk [vmem:[%s118 + $0x28] sm:$0xff] %vm213, %v208
      %220 = vst.msk [vmem:[%s118 + $0x30] sm:$0xff] %vm213, %v210
      %221 = vst.msk [vmem:[%s118 + $0x38] sm:$0xff] %vm213, %v212
      %s222 = smul.u32 8, %s12
      %p223 = scmp.lt.s32.totalorder %s222, 15
      %s224 = scalar_select %p223, %s222, 15
      %s225 = smul.addr %s224, 8
      %s226 = scalar_lea.vmem %s1, %s225
      // Predicated region
      $region25: #{tpu_custom_call.1} parent=23 // pred_check
        %p227 = pneg %p56
      $region26: #{tpu_custom_call.1} parent=23 // pred_check_branch
        %229 = sbr.rel (%p227) target = $region28
      $region27: #{tpu_custom_call.1} parent=23 // pred_region
        %s230 = smul.u32 8, %s12
      $region28: #{tpu_custom_call.1} parent=23 // pred_fallthru
        _
    $region24: #{tpu_custom_call.1} parent=5 // pred_fallthru
      _
    %p231 = scmp.le.s32.totalorder 2, %s7
    // Predicated region
    $region29: #{tpu_custom_call.1} parent=5 // pred_check
      %p232 = pneg %p231
    $region30: #{tpu_custom_call.1} parent=5 // pred_check_branch
      %234 = sbr.rel (%p232) target = $region32
    $region31: #{tpu_custom_call.1} parent=5 // pred_region
      %s235 = ssub.s32 %s7, 2
      // Predicated region
      $region33: #{tpu_custom_call.1} parent=31 // pred_check
        %p236 = pneg %p62
      $region34: #{tpu_custom_call.1} parent=31 // pred_check_branch
        %238 = sbr.rel (%p236) target = $region36
      $region35: #{tpu_custom_call.1} parent=31 // pred_region
        %s239 = smul.u32 8, %s13
        %p240 = scmp.lt.s32.totalorder %s239, 15
        %s241 = scalar_select %p240, %s239, 15
        %s242 = smul.addr %s241, 8
        %s243 = scalar_lea.vmem %s1, %s242
      $region36: #{tpu_custom_call.1} parent=31 // pred_fallthru
        _
    $region32: #{tpu_custom_call.1} parent=5 // pred_fallthru
      _
  $region6: #{tpu_custom_call.1} parent=0 // loop_footer
    %s11 = sadd.s32 1, %s7
  $region7: #{tpu_custom_call.1} parent=0 // loop_footer_branch
    %6 = sbr.rel target = $region3
  $region8: #{tpu_custom_call.1} parent=0 // loop_exit
    _

</llo_original>
